<compile_context>
chip_gen: v5e
topology: v5e:2x2
jax: 0.10.0
libtpu: 0.0.40
codegen_flags: <defaults>
</compile_context>

<pallas_src>
import functools
import math

import jax
import jax.numpy as jnp
from jax.experimental import pallas as pl
from jax.experimental.pallas import tpu as pltpu


_NEG_INF = -1e30   # finite: fully-masked rows give a uniform average of V, not NaN
_TK = 256          # key tile (fixed); q tile is generation-dependent


def _round_up(x, m):
    return ((x + m - 1) // m) * m


def _budget():
    """(vmem_limit_bytes, max_q_tile) chosen per TPU generation."""
    try:
        cap = int(pltpu.get_tpu_info().vmem_capacity_bytes)
    except Exception:
        cap = 64 * 1024 * 1024
    if cap >= 100 * 1024 * 1024:            # v5e / v6e: 128 MiB VMEM per core
        return 100 * 1024 * 1024, 1024
    if cap >= 60 * 1024 * 1024:             # v7x: 64 MiB VMEM per core
        return 48 * 1024 * 1024, 512
    return max(cap - 4 * 1024 * 1024, 16 * 1024 * 1024), 256


def _choose_tiles(n, tq_max):
    """Return (tq, tk, n_pad) with tq % tk == 0 and n_pad % tq == 0."""
    if n <= _TK:
        t = _round_up(n, 8)
        return t, t, t
    tk = _TK
    tq = min(tq_max, _round_up(n, tk))
    tq = max(tk, (tq // tk) * tk)
    return tq, tk, _round_up(n, tq)


# ---------------------------------------------------------------------------
# Kernel 1: LayerNorm + fused QKV projection   (grid = (B, seq_tiles))
# ---------------------------------------------------------------------------
def _ln_qkv_kernel(x_ref, gamma_ref, beta_ref, w_ref, qkv_ref, *, eps):
    x = x_ref[0].astype(jnp.float32)                          # (t, D)
    d = x.shape[-1]
    mean = jnp.sum(x, axis=-1, keepdims=True) / d
    xc = x - mean
    var = jnp.sum(xc * xc, axis=-1, keepdims=True) / d        # two-pass variance (stable)
    xn = xc * jax.lax.rsqrt(var + eps)
    xn = (xn * gamma_ref[0] + beta_ref[0]).astype(jnp.bfloat16)
    # single fused QKV matmul: (3*inner, D) x (t, D)^T -> (3*inner, t), f32 accumulate
    y = jax.lax.dot_general(w_ref[...], xn, (((1,), (1,)), ((), ())),
                            preferred_element_type=jnp.float32)
    qkv_ref[0] = y.astype(jnp.bfloat16)                       # one lane-dense store


# ---------------------------------------------------------------------------
# Kernel 2: flash attention (online softmax) + fused output projection
#           grid = (B, q_tiles, heads, k_tiles); heads & k are reduction axes
# ---------------------------------------------------------------------------
def _flash_kernel(*refs, has_mask):
    if has_mask:
        (q_ref, k_ref, v_ref, mask_ref, wout_ref, o_ref,
         q_scr, m_s, l_s, acc_s, out_s) = refs
    else:
        (q_ref, k_ref, v_ref, wout_ref, o_ref,
         q_scr, m_s, l_s, acc_s, out_s) = refs
        mask_ref = None

    h = pl.program_id(2)
    ki = pl.program_id(3)
    nh = pl.num_programs(2)
    nk = pl.num_programs(3)

    @pl.when(jnp.logical_and(h == 0, ki == 0))
    def _():                                   # new (batch, q-tile): clear output accumulator
        out_s[...] = jnp.zeros(out_s.shape, out_s.dtype)

    @pl.when(ki == 0)
    def _():                                   # new head: reset online-softmax state, stage q
        m_s[...] = jnp.full(m_s.shape, _NEG_INF, m_s.dtype)
        l_s[...] = jnp.zeros(l_s.shape, l_s.dtype)
        acc_s[...] = jnp.zeros(acc_s.shape, acc_s.dtype)
        # one transpose per (q tile, head); per-k-step matmuls then need no relayout
        q_scr[...] = q_ref[0].astype(jnp.float32).T.astype(jnp.bfloat16)   # (tq, dh)

    kt = k_ref[0]                              # (dh, tk) bf16, lane-dense
    vt = v_ref[0]                              # (dh, tk) bf16, lane-dense

    s = jnp.dot(q_scr[...], kt, preferred_element_type=jnp.float32)        # (tq, tk)
    if has_mask:
        s = s + mask_ref[0]                    # additive 0 / -1e30, pre-baked on host

    m_prev = m_s[...]
    m_new = jnp.maximum(m_prev, jnp.max(s, axis=-1, keepdims=True))
    alpha = jnp.exp(m_prev - m_new)
    p = jnp.exp(s - m_new)
    l_s[...] = alpha * l_s[...] + jnp.sum(p, axis=-1, keepdims=True)
    pv = jax.lax.dot_general(p.astype(jnp.bfloat16), vt, (((1,), (1,)), ((), ())),
                             preferred_element_type=jnp.float32)           # (tq, dh)
    acc_s[...] = alpha * acc_s[...] + pv
    m_s[...] = m_new

    @pl.when(ki == nk - 1)
    def _():                                   # this head done: fused per-head out-projection
        inv_l = pl.reciprocal(l_s[...], approx=True)                       # EUP
        out_h = (acc_s[...] * inv_l).astype(jnp.bfloat16)                  # (tq, dh)
        out_s[...] += jnp.dot(out_h, wout_ref[...],
                              preferred_element_type=jnp.float32)          # (tq, D)

    @pl.when(jnp.logical_and(h == nh - 1, ki == nk - 1))
    def _():
        o_ref[0] = out_s[...].astype(o_ref.dtype)


# ---------------------------------------------------------------------------
# Host-side wrappers
# ---------------------------------------------------------------------------
def prepare_params(gamma, beta, w_qkv, w_out, *, heads, dim_head):
    """Pre-layout weights once (outside the per-call path)."""
    gamma = jnp.asarray(gamma, jnp.float32)
    D = gamma.shape[-1]
    inner = heads * dim_head
    w_qkv = jnp.asarray(w_qkv, jnp.float32)            # (3*inner, D), PyTorch layout
    w_out = jnp.asarray(w_out, jnp.float32)            # (D, inner),   PyTorch layout
    scale = dim_head ** (-0.5)
    w_all = jnp.concatenate([w_qkv[:inner] * scale, w_qkv[inner:]], axis=0)  # scale in Wq
    return dict(
        gamma=gamma.reshape(1, D),
        beta=jnp.asarray(beta, jnp.float32).reshape(1, D),
        w_qkv=w_all.astype(jnp.bfloat16),               # (3*inner, D), fused
        w_out=w_out.T.astype(jnp.bfloat16),             # (inner, D)
    )


def attention_forward(x, params, *, heads, dim_head,
                      src_key_padding_mask=None, eps=1e-5):
    """x: (B, N, D).  src_key_padding_mask: (B, N), truthy == padded key."""
    B, N, D = x.shape
    inner = heads * dim_head
    H, dh = heads, dim_head

    vmem_limit, tq_max = _budget()
    tq, tk, n_pad = _choose_tiles(N, tq_max)
    pad = n_pad - N
    x_p = jnp.pad(x, ((0, 0), (0, pad), (0, 0))) if pad else x

    # ---- kernel 1: LayerNorm + fused QKV -> qkv_t (B, 3*inner, n_pad) bf16 ----
    qkv_t = pl.pallas_call(
        functools.partial(_ln_qkv_kernel, eps=eps),
        out_shape=jax.ShapeDtypeStruct((B, 3 * inner, n_pad), jnp.bfloat16),
        grid_spec=pltpu.PrefetchScalarGridSpec(
            num_scalar_prefetch=0,
            grid=(B, n_pad // tk),
            in_specs=[
                pl.BlockSpec((1, tk, D), lambda b, n: (b, n, 0)),        # x
                pl.BlockSpec((1, D), lambda b, n: (0, 0)),               # gamma
                pl.BlockSpec((1, D), lambda b, n: (0, 0)),               # beta
                pl.BlockSpec((3 * inner, D), lambda b, n: (0, 0)),       # fused W_qkv
            ],
            out_specs=pl.BlockSpec((1, 3 * inner, tk), lambda b, n: (b, 0, n)),
        ),
        compiler_params=pltpu.CompilerParams(
            dimension_semantics=("parallel", "parallel"),
            vmem_limit_bytes=vmem_limit),
    )(x_p, params["gamma"], params["beta"], params["w_qkv"])

    # ---- mask: statically specialized; additive (0 / -1e30), pre-baked on host ----
    has_mask = (src_key_padding_mask is not None) or (pad > 0)
    mask_args = ()
    mask_specs = []
    if has_mask:
        if src_key_padding_mask is None:
            add_mask = jnp.zeros((B, N), jnp.float32)
        else:
            add_mask = jnp.asarray(src_key_padding_mask).astype(jnp.float32) * _NEG_INF
        if pad:
            add_mask = jnp.pad(add_mask, ((0, 0), (0, pad)), constant_values=_NEG_INF)
        mask_args = (add_mask.reshape(B, 1, n_pad),)
        mask_specs = [pl.BlockSpec((1, 1, tk), lambda b, qi, h, ki: (b, 0, ki))]

    # ---- kernel 2: flash attention + fused output projection -> (B, n_pad, D) ----
    out = pl.pallas_call(
        functools.partial(_flash_kernel, has_mask=has_mask),
        out_shape=jax.ShapeDtypeStruct((B, n_pad, D), x.dtype),
        grid_spec=pltpu.PrefetchScalarGridSpec(
            num_scalar_prefetch=0,
            grid=(B, n_pad // tq, H, n_pad // tk),
            in_specs=[
                pl.BlockSpec((1, dh, tq), lambda b, qi, h, ki: (b, h, qi)),          # q^T head h
                pl.BlockSpec((1, dh, tk), lambda b, qi, h, ki: (b, H + h, ki)),      # k^T head h
                pl.BlockSpec((1, dh, tk), lambda b, qi, h, ki: (b, 2 * H + h, ki)),  # v^T head h
            ] + mask_specs + [
                pl.BlockSpec((dh, D), lambda b, qi, h, ki: (h, 0)),                  # W_out head h
            ],
            out_specs=pl.BlockSpec((1, tq, D), lambda b, qi, h, ki: (b, qi, 0)),
            scratch_shapes=[
                pltpu.VMEM((tq, dh), jnp.bfloat16),    # q staged as (tq, dh)
                pltpu.VMEM((tq, 1), jnp.float32),      # m (running max)
                pltpu.VMEM((tq, 1), jnp.float32),      # l (running denom)
                pltpu.VMEM((tq, dh), jnp.float32),     # per-head acc
                pltpu.VMEM((tq, D), jnp.float32),      # cross-head projected output
            ],
        ),
        compiler_params=pltpu.CompilerParams(
            dimension_semantics=("parallel", "parallel", "arbitrary", "arbitrary"),
            vmem_limit_bytes=vmem_limit),
    )(qkv_t, qkv_t, qkv_t, *mask_args, params["w_out"])

    return out[:, :N, :] if pad else out


# ---------------------------------------------------------------------------
# Pure-JAX reference (mirrors the PyTorch forward)
# ---------------------------------------------------------------------------
def _reference(x, gamma, beta, w_qkv, w_out, heads, dim_head, mask=None, eps=1e-5):
    B, N, D = x.shape
    inner = heads * dim_head
    mean = jnp.mean(x, axis=-1, keepdims=True)
    var = jnp.mean((x - mean) ** 2, axis=-1, keepdims=True)
    xn = (x - mean) / jnp.sqrt(var + eps) * gamma + beta
    qkv = xn @ w_qkv.T
    q, k, v = jnp.split(qkv, 3, axis=-1)

    def split_heads(t):
        return t.reshape(B, N, heads, dim_head).transpose(0, 2, 1, 3)

    q, k, v = map(split_heads, (q, k, v))
    q = q * dim_head ** (-0.5)
    sim = jnp.einsum('bhid,bhjd->bhij', q, k)
    if mask is not None:
        sim = jnp.where(mask[:, None, None, :], -jnp.inf, sim)
    attn = jax.nn.softmax(sim, axis=-1)
    out = jnp.einsum('bhij,bhjd->bhid', attn, v)
    out = out.transpose(0, 2, 1, 3).reshape(B, N, inner)
    return out @ w_out.T


if __name__ == "__main__":
    # Small, module-consistent shapes.
    B, N, DIM = 2, 8, 32
    HEADS, DIM_HEAD = 4, 16
    INNER = HEADS * DIM_HEAD

    key = jax.random.PRNGKey(0)
    kx, kq, ko = jax.random.split(key, 3)

    x = jax.random.normal(kx, (B, N, DIM), jnp.float32)
    w_qkv = jax.random.uniform(kq, (3 * INNER, DIM), jnp.float32,
                               -1.0 / math.sqrt(DIM), 1.0 / math.sqrt(DIM))
    w_out = jax.random.uniform(ko, (DIM, INNER), jnp.float32,
                               -1.0 / math.sqrt(INNER), 1.0 / math.sqrt(INNER))
    gamma = jnp.ones((DIM,), jnp.float32)   # LayerNorm default init
    beta = jnp.zeros((DIM,), jnp.float32)

    params = prepare_params(gamma, beta, w_qkv, w_out,
                            heads=HEADS, dim_head=DIM_HEAD)

    # --- no mask (exercises the mask-free specialized kernel) ---
    y = attention_forward(x, params, heads=HEADS, dim_head=DIM_HEAD)
    y = jax.block_until_ready(y)
    y_ref = _reference(x, gamma, beta, w_qkv, w_out, HEADS, DIM_HEAD)
    assert y.shape == (B, N, DIM)
    assert jnp.allclose(y, y_ref, atol=2.5e-2, rtol=2.5e-2), \
        f"mismatch vs reference (max abs err {jnp.max(jnp.abs(y - y_ref))})"

    # --- with key padding mask (PyTorch convention: True == padded key) ---
    mask = jnp.zeros((B, N), bool).at[1, -3:].set(True)
    y_m = attention_forward(x, params, heads=HEADS, dim_head=DIM_HEAD,
                            src_key_padding_mask=mask)
    y_m = jax.block_until_ready(y_m)
    y_m_ref = _reference(x, gamma, beta, w_qkv, w_out, HEADS, DIM_HEAD, mask=mask)
    assert jnp.allclose(y_m, y_m_ref, atol=2.5e-2, rtol=2.5e-2), \
        f"masked mismatch vs reference (max abs err {jnp.max(jnp.abs(y_m - y_m_ref))})"

    print("KERNEL_OK")
</pallas_src>

<mosaic_0001>
module attributes {stable_mosaic.version = 11 : i64} {
  func.func @_ln_qkv_kernel(%arg0: i32, %arg1: i32, %arg2: memref<1x8x32xf32, #tpu.memory_space<vmem>>, %arg3: memref<1x32xf32, #tpu.memory_space<vmem>>, %arg4: memref<1x32xf32, #tpu.memory_space<vmem>>, %arg5: memref<192x32xbf16, #tpu.memory_space<vmem>>, %arg6: memref<1x192x8xbf16, #tpu.memory_space<vmem>>) attributes {dimension_semantics = [#tpu.dimension_semantics<parallel>, #tpu.dimension_semantics<parallel>], iteration_bounds = array<i64: 2, 1>, scalar_prefetch = 0 : i64, scratch_operands = 0 : i64, tpu.core_type = #tpu.core_type<tc>, window_params = [{transform_indices = @transform_0, window_bounds = array<i64: 1, 8, 32>}, {pipeline_mode = #tpu.pipeline_mode<synchronous>, transform_indices = @transform_1, window_bounds = array<i64: 1, 32>}, {pipeline_mode = #tpu.pipeline_mode<synchronous>, transform_indices = @transform_2, window_bounds = array<i64: 1, 32>}, {pipeline_mode = #tpu.pipeline_mode<synchronous>, transform_indices = @transform_3, window_bounds = array<i64: 192, 32>}, {transform_indices = @transform_4, window_bounds = array<i64: 1, 192, 8>}]} {
    %c0 = arith.constant 0 : index
    %c0_0 = arith.constant 0 : index
    %c0_1 = arith.constant 0 : index
    %0 = vector.load %arg2[%c0, %c0_0, %c0_1] : memref<1x8x32xf32, #tpu.memory_space<vmem>>, vector<1x8x32xf32>
    %1 = vector.shape_cast %0 : vector<1x8x32xf32> to vector<8x32xf32>
    %cst = arith.constant dense<0.000000e+00> : vector<8xf32>
    %2 = vector.multi_reduction <add>, %1, %cst [1] : vector<8x32xf32> to vector<8xf32>
    %3 = vector.shape_cast %2 : vector<8xf32> to vector<8x1xf32>
    %cst_2 = arith.constant 3.200000e+01 : f32
    %4 = vector.broadcast %cst_2 : f32 to vector<8x1xf32>
    %5 = arith.divf %3, %4 : vector<8x1xf32>
    %6 = vector.broadcast %5 : vector<8x1xf32> to vector<8x32xf32>
    %7 = arith.subf %1, %6 : vector<8x32xf32>
    %8 = arith.mulf %7, %7 : vector<8x32xf32>
    %cst_3 = arith.constant dense<0.000000e+00> : vector<8xf32>
    %9 = vector.multi_reduction <add>, %8, %cst_3 [1] : vector<8x32xf32> to vector<8xf32>
    %10 = vector.shape_cast %9 : vector<8xf32> to vector<8x1xf32>
    %cst_4 = arith.constant 3.200000e+01 : f32
    %11 = vector.broadcast %cst_4 : f32 to vector<8x1xf32>
    %12 = arith.divf %10, %11 : vector<8x1xf32>
    %cst_5 = arith.constant 9.99999974E-6 : f32
    %13 = vector.broadcast %cst_5 : f32 to vector<8x1xf32>
    %14 = arith.addf %12, %13 : vector<8x1xf32>
    %15 = math.rsqrt %14 : vector<8x1xf32>
    %16 = vector.broadcast %15 : vector<8x1xf32> to vector<8x32xf32>
    %17 = arith.mulf %7, %16 : vector<8x32xf32>
    %c0_6 = arith.constant 0 : index
    %c0_7 = arith.constant 0 : index
    %18 = vector.load %arg3[%c0_6, %c0_7] : memref<1x32xf32, #tpu.memory_space<vmem>>, vector<1x32xf32>
    %19 = vector.shape_cast %18 : vector<1x32xf32> to vector<32xf32>
    %20 = vector.shape_cast %19 : vector<32xf32> to vector<1x32xf32>
    %21 = vector.broadcast %20 : vector<1x32xf32> to vector<8x32xf32>
    %22 = arith.mulf %17, %21 : vector<8x32xf32>
    %c0_8 = arith.constant 0 : index
    %c0_9 = arith.constant 0 : index
    %23 = vector.load %arg4[%c0_8, %c0_9] : memref<1x32xf32, #tpu.memory_space<vmem>>, vector<1x32xf32>
    %24 = vector.shape_cast %23 : vector<1x32xf32> to vector<32xf32>
    %25 = vector.shape_cast %24 : vector<32xf32> to vector<1x32xf32>
    %26 = vector.broadcast %25 : vector<1x32xf32> to vector<8x32xf32>
    %27 = arith.addf %22, %26 : vector<8x32xf32>
    %28 = arith.truncf %27 : vector<8x32xf32> to vector<8x32xbf16>
    %c0_10 = arith.constant 0 : index
    %c0_11 = arith.constant 0 : index
    %29 = vector.load %arg5[%c0_10, %c0_11] : memref<192x32xbf16, #tpu.memory_space<vmem>>, vector<192x32xbf16>
    %cst_12 = arith.constant dense<0.000000e+00> : vector<192x8xf32>
    %30 = tpu.matmul %29, %28, %cst_12 {dimension_numbers = #tpu.dot_dimension_numbers<[1], [1], [0], [0], [0, 0, 1, 0], [], []>} : vector<192x32xbf16>, vector<8x32xbf16>, vector<192x8xf32> -> vector<192x8xf32>
    %31 = arith.truncf %30 : vector<192x8xf32> to vector<192x8xbf16>
    %c0_13 = arith.constant 0 : index
    %c0_14 = arith.constant 0 : index
    %c0_15 = arith.constant 0 : index
    %32 = vector.load %arg6[%c0_13, %c0_14, %c0_15] : memref<1x192x8xbf16, #tpu.memory_space<vmem>>, vector<1x192x8xbf16>
    %33 = vector.shape_cast %32 : vector<1x192x8xbf16> to vector<192x8xbf16>
    %34 = vector.shape_cast %31 : vector<192x8xbf16> to vector<1x192x8xbf16>
    tpu.vector_store %arg6[%c0_13, %c0_14, %c0_15], %34 {strides = array<i32>} : memref<1x192x8xbf16, #tpu.memory_space<vmem>>, vector<1x192x8xbf16>,
    return
  }
  func.func @transform_0(%arg0: i32, %arg1: i32) -> (i32, i32, i32) {
    %c0_i32 = arith.constant 0 : i32
    %c0_i32_0 = arith.constant 0 : i32
    return %arg0, %arg1, %c0_i32 : i32, i32, i32
  }
  func.func @transform_1(%arg0: i32, %arg1: i32) -> (i32, i32) {
    %c0_i32 = arith.constant 0 : i32
    %c0_i32_0 = arith.constant 0 : i32
    %c0_i32_1 = arith.constant 0 : i32
    return %c0_i32, %c0_i32_0 : i32, i32
  }
  func.func @transform_2(%arg0: i32, %arg1: i32) -> (i32, i32) {
    %c0_i32 = arith.constant 0 : i32
    %c0_i32_0 = arith.constant 0 : i32
    %c0_i32_1 = arith.constant 0 : i32
    return %c0_i32, %c0_i32_0 : i32, i32
  }
  func.func @transform_3(%arg0: i32, %arg1: i32) -> (i32, i32) {
    %c0_i32 = arith.constant 0 : i32
    %c0_i32_0 = arith.constant 0 : i32
    %c0_i32_1 = arith.constant 0 : i32
    return %c0_i32, %c0_i32_0 : i32, i32
  }
  func.func @transform_4(%arg0: i32, %arg1: i32) -> (i32, i32, i32) {
    %c0_i32 = arith.constant 0 : i32
    %c0_i32_0 = arith.constant 0 : i32
    return %arg0, %c0_i32, %arg1 : i32, i32, i32
  }
}

</mosaic_0001>

<llo_original>
// kernel: tpu_custom_call.1
$region0: #{tpu_custom_call.1}
  #allocation0 [shape = 'u32[]', space=smem, size = 0x4, offset = 0x4, fixed_abs, tag = 'smem constant byte address 0x4 - core index']
  #allocation1 [shape = 'u32[72,128]{1,0:T(1,128)}', space=vmem, size = 0x9000, scoped, tag = 'internal scratch']
  %s0 = inlined_call_operand.vmem [shape: f32[2,8,32], index: 0, kind: input, shape index: {}]
  %s1 = inlined_call_operand.vmem [shape: f32[1,32], index: 1, kind: input, shape index: {}]
  %s2 = inlined_call_operand.vmem [shape: f32[1,32], index: 2, kind: input, shape index: {}]
  %s3 = inlined_call_operand.vmem [shape: bf16[192,32], index: 3, kind: input, shape index: {}]
  %s4 = inlined_call_operand.vmem [shape: bf16[2,192,8], index: 4, kind: output, shape index: {}]
  %s5 = sld [smem:[#allocation0]]
  $region49: #{tpu_custom_call.1} parent=0
    _
  %s7 = ssub.s32 1, %s5
  %s8 = scalar_select 0, %s7, %s5
  loop: start=0, step=1, limit=4
  $region2: #{tpu_custom_call.1} parent=0 // loop_pre_header
    _
  $region3: #{tpu_custom_call.1} parent=0 // loop_header
    %s10 = sphi 0, %s14
    %p11 = scmp.ge.s32.totalorder %s10, 4
    %s17 = sphi 0, %s29
    %s18 = sphi 0, %s25
    %s19 = sphi 0, %s17
    %s20 = sphi 0, %s18
    %s21 = sphi 0, %s19
    %s22 = sphi 0, %s20
    %s34 = sphi 0, %s36
    %s37 = sphi 0, %s34
    %s38 = sphi 0, %s37
    %s54 = sphi 0, %s38
    %s58 = sphi 0, %s58
    %s60 = sphi 0, %s58
    %s61 = sphi 0, %s60
    %s75 = sphi 0, %s61
    %s79 = sphi 0, %s79
    %s81 = sphi 0, %s79
    %s82 = sphi 0, %s81
    %s96 = sphi 0, %s82
    %s100 = sphi 0, %s100
    %s102 = sphi 0, %s100
    %s103 = sphi 0, %s102
    %s117 = sphi 0, %s103
    %s125 = sphi 0, %s127
    %s128 = sphi 0, %s125
    %s129 = sphi 0, %s128
    %s145 = sphi 0, %s129
  $region4: #{tpu_custom_call.1} parent=0 // loop_header_branch
    %13 = sbr.rel (%p11) target = $region8
  $region5: #{tpu_custom_call.1} parent=0 // loop_body
    %s15 = ssub.s32 %s10, 1
    %s16 = ssub.s32 %s10, 2
    %s23 = sadd.s32 1, %s18
    %p24 = scmp.ge.s32.totalorder %s23, 1
    %s25 = scalar_select %p24, 0, %s23
    %s26 = sadd.s32 1, %s17
    %s27 = scalar_select %p24, %s26, %s17
    %p28 = scmp.ge.s32.totalorder %s27, 2
    %s29 = scalar_select %p28, 0, %s27
    %s30 = ssub.s32 %s17, %s29
    %s31 = ssub.s32 %s18, %s25
    %s32 = sor.u32 %s30, %s31
    %p33 = scmp.eq.s32.totalorder %s32, 0
    %s35 = sadd.s32 %s34, 1
    %s36 = scalar_select %p33, %s34, %s35
    %p39 = pneg %p33
    %p40 = scmp.eq.s32.totalorder %s10, 1
    %p41 = por %p39, %p40
    %p42 = scmp.ne.s32.totalorder %s34, %s37
    %p43 = scmp.eq.s32.totalorder %s10, 0
    %p44 = por %p42, %p43
    %p45 = scmp.ne.s32.totalorder %s34, %s37
    %p46 = scmp.eq.s32.totalorder %s15, 1
    %p47 = por %p45, %p46
    %p48 = scmp.ne.s32.totalorder %s37, %s38
    %p49 = scmp.eq.s32.totalorder %s15, 0
    %p50 = por %p48, %p49
    %p51 = scmp.ne.s32.totalorder %s37, %s38
    %p52 = scmp.eq.s32.totalorder %s16, 1
    %p53 = por %p51, %p52
    %p55 = scmp.ne.s32.totalorder %s38, %s54
    %p56 = scmp.eq.s32.totalorder %s16, 0
    %p57 = por %p55, %p56
    %s59 = sadd.s32 %s58, 1
    %p62 = scmp.eq.s32.totalorder %s10, 1
    %p63 = scmp.ne.s32.totalorder %s58, %s60
    %p64 = scmp.eq.s32.totalorder %s10, 0
    %p65 = por %p63, %p64
    %p66 = scmp.ne.s32.totalorder %s58, %s60
    %p67 = scmp.eq.s32.totalorder %s15, 1
    %p68 = por %p66, %p67
    %p69 = scmp.ne.s32.totalorder %s60, %s61
    %p70 = scmp.eq.s32.totalorder %s15, 0
    %p71 = por %p69, %p70
    %p72 = scmp.ne.s32.totalorder %s60, %s61
    %p73 = scmp.eq.s32.totalorder %s16, 1
    %p74 = por %p72, %p73
    %p76 = scmp.ne.s32.totalorder %s61, %s75
    %p77 = scmp.eq.s32.totalorder %s16, 0
    %p78 = por %p76, %p77
    %s80 = sadd.s32 %s79, 1
    %p83 = scmp.eq.s32.totalorder %s10, 1
    %p84 = scmp.ne.s32.totalorder %s79, %s81
    %p85 = scmp.eq.s32.totalorder %s10, 0
    %p86 = por %p84, %p85
    %p87 = scmp.ne.s32.totalorder %s79, %s81
    %p88 = scmp.eq.s32.totalorder %s15, 1
    %p89 = por %p87, %p88
    %p90 = scmp.ne.s32.totalorder %s81, %s82
    %p91 = scmp.eq.s32.totalorder %s15, 0
    %p92 = por %p90, %p91
    %p93 = scmp.ne.s32.totalorder %s81, %s82
    %p94 = scmp.eq.s32.totalorder %s16, 1
    %p95 = por %p93, %p94
    %p97 = scmp.ne.s32.totalorder %s82, %s96
    %p98 = scmp.eq.s32.totalorder %s16, 0
    %p99 = por %p97, %p98
    %s101 = sadd.s32 %s100, 1
    %p104 = scmp.eq.s32.totalorder %s10, 1
    %p105 = scmp.ne.s32.totalorder %s100, %s102
    %p106 = scmp.eq.s32.totalorder %s10, 0
    %p107 = por %p105, %p106
    %p108 = scmp.ne.s32.totalorder %s100, %s102
    %p109 = scmp.eq.s32.totalorder %s15, 1
    %p110 = por %p108, %p109
    %p111 = scmp.ne.s32.totalorder %s102, %s103
    %p112 = scmp.eq.s32.totalorder %s15, 0
    %p113 = por %p111, %p112
    %p114 = scmp.ne.s32.totalorder %s102, %s103
    %p115 = scmp.eq.s32.totalorder %s16, 1
    %p116 = por %p114, %p115
    %p118 = scmp.ne.s32.totalorder %s103, %s117
    %p119 = scmp.eq.s32.totalorder %s16, 0
    %p120 = por %p118, %p119
    %s121 = ssub.s32 %s17, %s29
    %s122 = ssub.s32 %s18, %s25
    %s123 = sor.u32 %s121, %s122
    %p124 = scmp.eq.s32.totalorder %s123, 0
    %s126 = sadd.s32 %s125, 1
    %s127 = scalar_select %p124, %s125, %s126
    %p130 = pneg %p124
    %p131 = scmp.eq.s32.totalorder %s10, 1
    %p132 = por %p130, %p131
    %p133 = scmp.ne.s32.totalorder %s125, %s128
    %p134 = scmp.eq.s32.totalorder %s10, 0
    %p135 = por %p133, %p134
    %p136 = scmp.ne.s32.totalorder %s125, %s128
    %p137 = scmp.eq.s32.totalorder %s15, 1
    %p138 = por %p136, %p137
    %p139 = scmp.ne.s32.totalorder %s128, %s129
    %p140 = scmp.eq.s32.totalorder %s15, 0
    %p141 = por %p139, %p140
    %p142 = scmp.ne.s32.totalorder %s128, %s129
    %p143 = scmp.eq.s32.totalorder %s16, 1
    %p144 = por %p142, %p143
    %p146 = scmp.ne.s32.totalorder %s129, %s145
    %p147 = scmp.eq.s32.totalorder %s16, 0
    %p148 = por %p146, %p147
    %p149 = scmp.le.s32.totalorder 1, %s10
    %p150 = scmp.lt.s32.totalorder %s10, 3
    %p151 = pnand %p149, %p150
    %p152 = pneg %p151
    // Predicated region
    $region9: #{tpu_custom_call.1} parent=5 // pred_check
      _
    $region10: #{tpu_custom_call.1} parent=5 // pred_check_branch
      %154 = sbr.rel (%p151) target = $region12
    $region11: #{tpu_custom_call.1} parent=5 // pred_region
      %s155 = ssub.s32 %s10, 1
      // Predicated region
      $region13: #{tpu_custom_call.1} parent=11 // pred_check
        %p156 = pneg %p71
      $region14: #{tpu_custom_call.1} parent=11 // pred_check_branch
        %158 = sbr.rel (%p156) target = $region16
      $region15: #{tpu_custom_call.1} parent=11 // pred_region
        _
      $region16: #{tpu_custom_call.1} parent=11 // pred_fallthru
        _
      // Predicated region
      $region17: #{tpu_custom_call.1} parent=11 // pred_check
        %p159 = pneg %p92
      $region18: #{tpu_custom_call.1} parent=11 // pred_check_branch
        %161 = sbr.rel (%p159) target = $region20
      $region19: #{tpu_custom_call.1} parent=11 // pred_region
        _
      $region20: #{tpu_custom_call.1} parent=11 // pred_fallthru
        _
      // Predicated region
      $region21: #{tpu_custom_call.1} parent=11 // pred_check
        %p162 = pneg %p113
      $region22: #{tpu_custom_call.1} parent=11 // pred_check_branch
        %164 = sbr.rel (%p162) target = $region24
      $region23: #{tpu_custom_call.1} parent=11 // pred_region
        _
      $region24: #{tpu_custom_call.1} parent=11 // pred_fallthru
        _
    $region12: #{tpu_custom_call.1} parent=5 // pred_fallthru
      _
    %p165 = scmp.lt.s32.totalorder %s10, 2
    // Predicated region
    $region25: #{tpu_custom_call.1} parent=5 // pred_check
      %p166 = pneg %p165
    $region26: #{tpu_custom_call.1} parent=5 // pred_check_branch
      %168 = sbr.rel (%p166) target = $region28
    $region27: #{tpu_custom_call.1} parent=5 // pred_region
      // Predicated region
      $region29: #{tpu_custom_call.1} parent=27 // pred_check
        %p169 = pneg %p44
      $region30: #{tpu_custom_call.1} parent=27 // pred_check_branch
        %171 = sbr.rel (%p169) target = $region32
      $region31: #{tpu_custom_call.1} parent=27 // pred_region
        %p172 = scmp.lt.s32.totalorder %s17, 1
        %s173 = scalar_select %p172, %s17, 1
        %p174 = scmp.lt.s32.totalorder %s18, 0
        %s175 = scalar_select %p174, %s18, 0
        %s176 = sadd.s32 %s175, %s173
        %s177 = smul.addr %s176, 8
        %s178 = scalar_lea.vmem %s0, %s177
      $region32: #{tpu_custom_call.1} parent=27 // pred_fallthru
        _
    $region28: #{tpu_custom_call.1} parent=5 // pred_fallthru
      _
    %p179 = scmp.le.s32.totalorder 1, %s10
    %p180 = scmp.lt.s32.totalorder %s10, 3
    %p181 = pnand %p179, %p180
    %p182 = pneg %p181
    // Predicated region
    $region33: #{tpu_custom_call.1} parent=5 // pred_check
      _
    $region34: #{tpu_custom_call.1} parent=5 // pred_check_branch
      %184 = sbr.rel (%p181) target = $region36
    $region35: #{tpu_custom_call.1} parent=5 // pred_region
      %s185 = ssub.s32 %s10, 1
      %p186 = scmp.lt.s32.totalorder %s19, 1
      %s187 = scalar_select %p186, %s19, 1
      %p188 = scmp.lt.s32.totalorder %s20, 0
      %s189 = scalar_select %p188, %s20, 0
      %s190 = sadd.s32 %s189, %s187
      %s191 = smul.addr %s190, 8
      %s192 = scalar_lea.vmem %s0, %s191
      %p193 = pneg %p50
      %p194 = pneg %p47
      %p195 = pneg %p71
      %p196 = pneg %p68
      %p197 = pneg %p92
      %p198 = pneg %p89
      %p199 = pneg %p113
      %p200 = pneg %p110
      %p201 = pneg %p141
      %p202 = pneg %p138
      %p203 = scmp.lt.s32.totalorder %s19, 1
      %s204 = scalar_select %p203, %s19, 1
      %p205 = scmp.lt.s32.totalorder %s20, 0
      %s206 = scalar_select %p205, %s20, 0
      %s207 = smul.addr %s204, 24
      %s208 = sadd.s32 %s206, %s207
      %s209 = smul.addr %s208, 4
      %s210 = scalar_lea.vmem %s4, %s209
      %p211 = scmp.lt.s32.totalorder %s19, 1
      %s212 = scalar_select %p211, %s19, 1
      %p213 = scmp.lt.s32.totalorder %s20, 0
      %s214 = scalar_select %p213, %s20, 0
      %s215 = sadd.s32 %s214, %s212
      %s216 = smul.addr %s215, 8
      %s217 = scalar_lea.vmem %s0, %s216
      %p218 = scmp.lt.s32.totalorder %s19, 1
      %s219 = scalar_select %p218, %s19, 1
      %p220 = scmp.lt.s32.totalorder %s20, 0
      %s221 = scalar_select %p220, %s20, 0
      %s222 = smul.addr %s219, 24
      %s223 = sadd.s32 %s221, %s222
      %s224 = smul.addr %s223, 4
      %s225 = scalar_lea.vmem %s4, %s224
      %v227 = vld [vmem:[%s217] sm:$0xff]
      %vm228 = vcmask 261120
      %v229 = vsel %vm228, %v227, 0.0
      %230 = vadd.xlane.f32.xlu0 %v229
      %v231 = vpop.xlane.xlu0 %230
      %v232 = vrcp.pop 32.0
      %v233 = vmul.f32 32.0, %v232
      %v234 = vsub.f32 1.0, %v233
      %v235 = vmul.f32 %v232, %v234
      %v236 = vadd.f32 %v232, %v235
      %vm237 = vweird.f32 %v232
      %v238 = vsel %vm237, %v232, %v236
      %v239 = vmul.f32 %v231, %v238
      %v240 = vsub.f32 %v227, %v239
      %v241 = vmul.f32 %v240, %v240
      %v242 = vsel %vm228, %v241, 0.0
      %243 = vadd.xlane.f32.xlu0 %v242
      %v244 = vpop.xlane.xlu0 %243
      %v245 = vmul.f32 %v244, %v238
      %v246 = vadd.f32 %v245, 1e-05
      %v247 = vrsqrt.pop %v246
      %v248 = vmul.f32 %v247, %v246
      %v249 = vmul.f32 %v248, %v247
      %v250 = vmul.f32 0.5, %v249
      %v251 = vsub.f32 1.5, %v250
      %v252 = vmul.f32 %v247, %v251
      %vm253 = vweird.f32 %v246
      %vm254 = vweird.f32 %v247
      %vm255 = vmor %vm253, %vm254
      %v256 = vsel %vm255, %v247, %v252
      %v257 = vmul.f32 %v240, %v256
      %v258 = vld [vmem:[%s1] sm:$0x1]
      %v260 = vperm.slane %v258, 0
      %v262 = vmul.f32 %v257, %v260
      %v263 = vld [vmem:[%s2] sm:$0x1]
      %v265 = vperm.slane %v263, 0
      %v267 = vadd.f32 %v262, %v265
      %v268 = vpack.c.bf16 %v267, %v267
      %v269 = vld [vmem:[%s3] sm:$0xf]
      %v270 = vld [vmem:[%s3 + $0x4] sm:$0xf]
      %v271 = vld [vmem:[%s3 + $0x8] sm:$0xf]
      %v272 = vld [vmem:[%s3 + $0xc] sm:$0xf]
      %v273 = vld [vmem:[%s3 + $0x10] sm:$0xf]
      %v274 = vld [vmem:[%s3 + $0x14] sm:$0xf]
      %v275 = vld [vmem:[%s3 + $0x18] sm:$0xf]
      %v276 = vld [vmem:[%s3 + $0x1c] sm:$0xf]
      %v277 = vld [vmem:[%s3 + $0x20] sm:$0xf]
      %v278 = vld [vmem:[%s3 + $0x24] sm:$0xf]
      %v279 = vld [vmem:[%s3 + $0x28] sm:$0xf]
      %v280 = vld [vmem:[%s3 + $0x2c] sm:$0xf]
      %v281 = vld [vmem:[%s3 + $0x30] sm:$0xf]
      %v282 = vld [vmem:[%s3 + $0x34] sm:$0xf]
      %v283 = vld [vmem:[%s3 + $0x38] sm:$0xf]
      %v284 = vld [vmem:[%s3 + $0x3c] sm:$0xf]
      %v285 = vld [vmem:[%s3 + $0x40] sm:$0xf]
      %v286 = vld [vmem:[%s3 + $0x44] sm:$0xf]
      %v287 = vld [vmem:[%s3 + $0x48] sm:$0xf]
      %v288 = vld [vmem:[%s3 + $0x4c] sm:$0xf]
      %v289 = vld [vmem:[%s3 + $0x50] sm:$0xf]
      %v290 = vld [vmem:[%s3 + $0x54] sm:$0xf]
      %v291 = vld [vmem:[%s3 + $0x58] sm:$0xf]
      %v292 = vld [vmem:[%s3 + $0x5c] sm:$0xf]
      %v317 = vunpack.c.l.b16 %v269
      %v318 = vunpack.c.l.b16 %v270
      %v319 = vunpack.c.l.b16 %v271
      %v320 = vunpack.c.l.b16 %v272
      %v321 = vunpack.c.l.b16 %v273
      %v322 = vunpack.c.l.b16 %v274
      %v323 = vunpack.c.l.b16 %v275
      %v324 = vunpack.c.l.b16 %v276
      %v325 = vunpack.c.l.b16 %v277
      %v326 = vunpack.c.l.b16 %v278
      %v327 = vunpack.c.l.b16 %v279
      %v328 = vunpack.c.l.b16 %v280
      %v329 = vunpack.c.l.b16 %v281
      %v330 = vunpack.c.l.b16 %v282
      %v331 = vunpack.c.l.b16 %v283
      %v332 = vunpack.c.l.b16 %v284
      %v333 = vunpack.c.l.b16 %v285
      %v334 = vunpack.c.l.b16 %v286
      %v335 = vunpack.c.l.b16 %v287
      %v336 = vunpack.c.l.b16 %v288
      %v337 = vunpack.c.l.b16 %v289
      %v338 = vunpack.c.l.b16 %v290
      %v339 = vunpack.c.l.b16 %v291
      %v340 = vunpack.c.l.b16 %v292
      %v341 = vpack.c.b16 %v318, %v317
      %v342 = vpack.c.b16 %v320, %v319
      %v343 = vpack.c.b16 %v322, %v321
      %v344 = vpack.c.b16 %v324, %v323
      %v345 = vpack.c.b16 %v326, %v325
      %v346 = vpack.c.b16 %v328, %v327
      %v347 = vpack.c.b16 %v330, %v329
      %v348 = vpack.c.b16 %v332, %v331
      %v349 = vpack.c.b16 %v334, %v333
      %v350 = vpack.c.b16 %v336, %v335
      %v351 = vpack.c.b16 %v338, %v337
      %v352 = vpack.c.b16 %v340, %v339
      %v354 = vsel %vm228, %v341, 0
      %v357 = vsel %vm228, %v342, 0
      %v360 = vsel %vm228, %v343, 0
      %v363 = vsel %vm228, %v344, 0
      %v366 = vsel %vm228, %v345, 0
      %v369 = vsel %vm228, %v346, 0
      %v372 = vsel %vm228, %v347, 0
      %v375 = vsel %vm228, %v348, 0
      %v378 = vsel %vm228, %v349, 0
      %v381 = vsel %vm228, %v350, 0
      %v384 = vsel %vm228, %v351, 0
      %v387 = vsel %vm228, %v352, 0
      %v390 = vsel %vm228, %v268, 0
      %392 = vmatpush.bf16.xpose.msra.mxu0 0
      %393 = vmatpush.bf16.xpose.msra.mxu0 0
      %394 = vmatpush.bf16.xpose.msra.mxu0 0
      %395 = vmatpush.bf16.xpose.msra.mxu0 0
      %396 = vmatpush.bf16.xpose.msra.mxu0 0
      %397 = vmatpush.bf16.xpose.msra.mxu0 0
      %398 = vmatpush.bf16.xpose.msra.mxu0 0
      %399 = vmatpush.bf16.xpose.msra.mxu0 %v390
      %400 = vmatmul.bf16.gmra.mxu0 %v354
      %v401 = vpop.f32.mrf.mxu0
      %v402 = vadd.f32 0.0, %v401
      %v403 = vpop.f32.mrf.mxu0
      %v404 = vadd.f32 0.0, %v403
      %405 = vmatmul.bf16.gmra.mxu0 %v357
      %v406 = vpop.f32.mrf.mxu0
      %v407 = vadd.f32 0.0, %v406
      %v408 = vpop.f32.mrf.mxu0
      %v409 = vadd.f32 0.0, %v408
      %410 = vmatmul.bf16.gmra.mxu0 %v360
      %v411 = vpop.f32.mrf.mxu0
      %v412 = vadd.f32 0.0, %v411
      %v413 = vpop.f32.mrf.mxu0
      %v414 = vadd.f32 0.0, %v413
      %415 = vmatmul.bf16.gmra.mxu0 %v363
      %v416 = vpop.f32.mrf.mxu0
      %v417 = vadd.f32 0.0, %v416
      %v418 = vpop.f32.mrf.mxu0
      %v419 = vadd.f32 0.0, %v418
      %420 = vmatmul.bf16.gmra.mxu0 %v366
      %v421 = vpop.f32.mrf.mxu0
      %v422 = vadd.f32 0.0, %v421
      %v423 = vpop.f32.mrf.mxu0
      %v424 = vadd.f32 0.0, %v423
      %425 = vmatmul.bf16.gmra.mxu0 %v369
      %v426 = vpop.f32.mrf.mxu0
      %v427 = vadd.f32 0.0, %v426
      %v428 = vpop.f32.mrf.mxu0
      %v429 = vadd.f32 0.0, %v428
      %430 = vmatmul.bf16.gmra.mxu0 %v372
      %v431 = vpop.f32.mrf.mxu0
      %v432 = vadd.f32 0.0, %v431
      %v433 = vpop.f32.mrf.mxu0
      %v434 = vadd.f32 0.0, %v433
      %435 = vmatmul.bf16.gmra.mxu0 %v375
      %v436 = vpop.f32.mrf.mxu0
      %v437 = vadd.f32 0.0, %v436
      %v438 = vpop.f32.mrf.mxu0
      %v439 = vadd.f32 0.0, %v438
      %440 = vmatmul.bf16.gmra.mxu0 %v378
      %v441 = vpop.f32.mrf.mxu0
      %v442 = vadd.f32 0.0, %v441
      %v443 = vpop.f32.mrf.mxu0
      %v444 = vadd.f32 0.0, %v443
      %445 = vmatmul.bf16.gmra.mxu0 %v381
      %v446 = vpop.f32.mrf.mxu0
      %v447 = vadd.f32 0.0, %v446
      %v448 = vpop.f32.mrf.mxu0
      %v449 = vadd.f32 0.0, %v448
      %450 = vmatmul.bf16.gmra.mxu0 %v384
      %v451 = vpop.f32.mrf.mxu0
      %v452 = vadd.f32 0.0, %v451
      %v453 = vpop.f32.mrf.mxu0
      %v454 = vadd.f32 0.0, %v453
      %455 = vmatmul.bf16.gmra.mxu0 %v387
      %v456 = vpop.f32.mrf.mxu0
      %v457 = vadd.f32 0.0, %v456
      %v458 = vpop.f32.mrf.mxu0
      %v459 = vadd.f32 0.0, %v458
      %460 = vdwg.mxu0
      %v461 = vpack.c.bf16 %v402, %v402
      %v462 = vpack.c.bf16 %v404, %v404
      %v463 = vpack.c.bf16 %v407, %v407
      %v464 = vpack.c.bf16 %v409, %v409
      %v465 = vpack.c.bf16 %v412, %v412
      %v466 = vpack.c.bf16 %v414, %v414
      %v467 = vpack.c.bf16 %v417, %v417
      %v468 = vpack.c.bf16 %v419, %v419
      %v469 = vpack.c.bf16 %v422, %v422
      %v470 = vpack.c.bf16 %v424, %v424
      %v471 = vpack.c.bf16 %v427, %v427
      %v472 = vpack.c.bf16 %v429, %v429
      %v473 = vpack.c.bf16 %v432, %v432
      %v474 = vpack.c.bf16 %v434, %v434
      %v475 = vpack.c.bf16 %v437, %v437
      %v476 = vpack.c.bf16 %v439, %v439
      %v477 = vpack.c.bf16 %v442, %v442
      %v478 = vpack.c.bf16 %v444, %v444
      %v479 = vpack.c.bf16 %v447, %v447
      %v480 = vpack.c.bf16 %v449, %v449
      %v481 = vpack.c.bf16 %v452, %v452
      %v482 = vpack.c.bf16 %v454, %v454
      %v483 = vpack.c.bf16 %v457, %v457
      %v484 = vpack.c.bf16 %v459, %v459
      %vm485 = vcmask 60416
      %486 = vst.msk [vmem:[%s225] sm:$0xf] %vm485, %v461
      %487 = vst.msk [vmem:[%s225 + $0x4] sm:$0xf] %vm485, %v462
      %488 = vst.msk [vmem:[%s225 + $0x8] sm:$0xf] %vm485, %v463
      %489 = vst.msk [vmem:[%s225 + $0xc] sm:$0xf] %vm485, %v464
      %490 = vst.msk [vmem:[%s225 + $0x10] sm:$0xf] %vm485, %v465
      %491 = vst.msk [vmem:[%s225 + $0x14] sm:$0xf] %vm485, %v466
      %492 = vst.msk [vmem:[%s225 + $0x18] sm:$0xf] %vm485, %v467
      %493 = vst.msk [vmem:[%s225 + $0x1c] sm:$0xf] %vm485, %v468
      %494 = vst.msk [vmem:[%s225 + $0x20] sm:$0xf] %vm485, %v469
      %495 = vst.msk [vmem:[%s225 + $0x24] sm:$0xf] %vm485, %v470
      %496 = vst.msk [vmem:[%s225 + $0x28] sm:$0xf] %vm485, %v471
      %497 = vst.msk [vmem:[%s225 + $0x2c] sm:$0xf] %vm485, %v472
      %498 = vst.msk [vmem:[%s225 + $0x30] sm:$0xf] %vm485, %v473
      %499 = vst.msk [vmem:[%s225 + $0x34] sm:$0xf] %vm485, %v474
      %500 = vst.msk [vmem:[%s225 + $0x38] sm:$0xf] %vm485, %v475
      %501 = vst.msk [vmem:[%s225 + $0x3c] sm:$0xf] %vm485, %v476
      %502 = vst.msk [vmem:[%s225 + $0x40] sm:$0xf] %vm485, %v477
      %503 = vst.msk [vmem:[%s225 + $0x44] sm:$0xf] %vm485, %v478
      %504 = vst.msk [vmem:[%s225 + $0x48] sm:$0xf] %vm485, %v479
      %505 = vst.msk [vmem:[%s225 + $0x4c] sm:$0xf] %vm485, %v480
      %506 = vst.msk [vmem:[%s225 + $0x50] sm:$0xf] %vm485, %v481
      %507 = vst.msk [vmem:[%s225 + $0x54] sm:$0xf] %vm485, %v482
      %508 = vst.msk [vmem:[%s225 + $0x58] sm:$0xf] %vm485, %v483
      %509 = vst.msk [vmem:[%s225 + $0x5c] sm:$0xf] %vm485, %v484
      %p510 = scmp.lt.s32.totalorder %s19, 1
      %s511 = scalar_select %p510, %s19, 1
      %p512 = scmp.lt.s32.totalorder %s20, 0
      %s513 = scalar_select %p512, %s20, 0
      %s514 = smul.addr %s511, 24
      %s515 = sadd.s32 %s513, %s514
      %s516 = smul.addr %s515, 4
      %s517 = scalar_lea.vmem %s4, %s516
      // Predicated region
      $region37: #{tpu_custom_call.1} parent=35 // pred_check
        %p518 = pneg %p138
      $region38: #{tpu_custom_call.1} parent=35 // pred_check_branch
        %520 = sbr.rel (%p518) target = $region40
      $region39: #{tpu_custom_call.1} parent=35 // pred_region
        _
      $region40: #{tpu_custom_call.1} parent=35 // pred_fallthru
        _
    $region36: #{tpu_custom_call.1} parent=5 // pred_fallthru
      _
    %p521 = scmp.le.s32.totalorder 2, %s10
    // Predicated region
    $region41: #{tpu_custom_call.1} parent=5 // pred_check
      %p522 = pneg %p521
    $region42: #{tpu_custom_call.1} parent=5 // pred_check_branch
      %524 = sbr.rel (%p522) target = $region44
    $region43: #{tpu_custom_call.1} parent=5 // pred_region
      %s525 = ssub.s32 %s10, 2
      // Predicated region
      $region45: #{tpu_custom_call.1} parent=43 // pred_check
        %p526 = pneg %p144
      $region46: #{tpu_custom_call.1} parent=43 // pred_check_branch
        %528 = sbr.rel (%p526) target = $region48
      $region47: #{tpu_custom_call.1} parent=43 // pred_region
        %p529 = scmp.lt.s32.totalorder %s21, 1
        %s530 = scalar_select %p529, %s21, 1
        %p531 = scmp.lt.s32.totalorder %s22, 0
        %s532 = scalar_select %p531, %s22, 0
        %s533 = smul.addr %s530, 24
        %s534 = sadd.s32 %s532, %s533
        %s535 = smul.addr %s534, 4
        %s536 = scalar_lea.vmem %s4, %s535
      $region48: #{tpu_custom_call.1} parent=43 // pred_fallthru
        _
    $region44: #{tpu_custom_call.1} parent=5 // pred_fallthru
      _
  $region6: #{tpu_custom_call.1} parent=0 // loop_footer
    %s14 = sadd.s32 1, %s10
  $region7: #{tpu_custom_call.1} parent=0 // loop_footer_branch
    %9 = sbr.rel target = $region3
  $region8: #{tpu_custom_call.1} parent=0 // loop_exit
    _

</llo_original>
